<compile_context>
chip_gen: v7x
topology: tpu7x:2x2x1
jax: 0.10.0
libtpu: 0.0.40
codegen_flags: <defaults>
</compile_context>

<pallas_src>
import math

import jax
import jax.numpy as jnp
from jax.experimental import pallas as pl
from jax.experimental.pallas import tpu as pltpu


def _round_up(x, m):
    return ((x + m - 1) // m) * m


def _sublane_multiple(itemsize):
    # (8, 128) vreg tiling: sub-32-bit dtypes pack along sublanes.
    return {4: 8, 2: 16, 1: 32}.get(int(itemsize), 8)


def _vmem_tile_bytes(rows, cols, itemsize):
    # Actual VMEM footprint of a (rows, cols) tile incl. sublane/lane padding.
    r = _round_up(max(int(rows), 1), _sublane_multiple(itemsize))
    c = _round_up(max(int(cols), 1), 128)
    return r * c * int(itemsize)


def _vmem_capacity_bytes():
    try:
        cap = getattr(pltpu.get_tpu_info(), "vmem_capacity_bytes", None)
        if cap:
            return int(cap)
    except Exception:
        pass
    return 64 << 20  # conservative fallback (v7x per-TensorCore VMEM)


def _plan(M, input_dim, embed_dim, x_isz, w_isz, o_isz):
    """Static tiling plan from shapes/dtypes only (safe to cache per config)."""
    vmem_cap = _vmem_capacity_bytes()
    budget = int(vmem_cap * 0.45)  # ~28 MiB on 64 MiB parts, ~57 MiB on 128 MiB

    n128 = _round_up(embed_dim, 128)
    resident_w = (_vmem_tile_bytes(input_dim, n128, w_isz)
                  + _vmem_tile_bytes(1, n128, 4))

    tile_n = resident_w > budget // 2
    if tile_n:
        # Stream the weight in (K, TN) tiles: largest TN whose double buffer
        # stays within ~1/3 of the budget.
        tn = 128
        for cand in (2048, 1024, 512, 256, 128):
            if 2 * _vmem_tile_bytes(input_dim, cand, w_isz) <= budget // 3:
                tn = cand
                break
        n_eff = _round_up(embed_dim, tn)
        w_bufs = 2
    else:
        # Resident weight.  Pad N to a lane-dense multiple of 128 only when
        # lane occupancy stays >= 50%; otherwise keep the output unpadded.
        n_eff = n128 if embed_dim * 2 >= n128 else embed_dim
        tn = n_eff
        w_bufs = 1  # single-buffered via pl.Buffered(1)

    resident = w_bufs * (_vmem_tile_bytes(input_dim, tn, w_isz)
                         + _vmem_tile_bytes(1, tn, 4))

    # Per-row VMEM cost of the double-buffered x / out tiles (lane-padded).
    per_row = 2 * (_round_up(input_dim, 128) * x_isz
                   + _round_up(tn, 128) * o_isz)
    avail = budget - resident
    tm = avail // per_row if avail > per_row * 8 else 8
    tm = min(tm, 1024 if x_isz >= 4 else 2048, _round_up(M, 8))
    if M >= 256:
        # Keep >= 2 row tiles so dimension_semantics=("parallel",) can spread
        # them across both v7x TensorCores.
        tm = min(tm, _round_up(pl.cdiv(M, 2), 8))
    tm = max(8, (tm // 8) * 8)

    vmem_need = (2 * _vmem_tile_bytes(tm, input_dim, x_isz)
                 + 2 * _vmem_tile_bytes(tm, tn, o_isz)
                 + w_bufs * _vmem_tile_bytes(input_dim, tn, w_isz)
                 + w_bufs * _vmem_tile_bytes(1, tn, 4))
    vmem_limit = max(vmem_need + (4 << 20), 32 << 20)
    vmem_limit = min(vmem_limit, int(vmem_cap * 0.9))
    vmem_limit = max(vmem_limit, vmem_need + (2 << 20))  # never below need
    vmem_limit = min(vmem_limit, vmem_cap)

    return dict(tile_n=tile_n, n_eff=n_eff, tn=tn, tm=tm,
                vmem_limit=int(vmem_limit))


def prepare_params(weight, bias, *, n_total=None, compute_dtype=None):
    """One-time parameter prep (cacheable across forward passes).

    weight [embed_dim, input_dim] -> W^T [input_dim, n_total] (optionally
    zero-padded along N, optionally cast to compute_dtype); bias -> f32
    [1, n_total].  Padding columns are exact zeros, numerically inert.
    """
    embed_dim = weight.shape[0]
    w_t = jnp.transpose(weight)  # single HBM-side transpose, not per grid step
    b = bias
    if n_total is not None and n_total > embed_dim:
        w_t = jnp.pad(w_t, ((0, 0), (0, n_total - embed_dim)))
        b = jnp.pad(b, (0, n_total - embed_dim))
    if compute_dtype is not None:
        w_t = w_t.astype(compute_dtype)
    return w_t, b.astype(jnp.float32).reshape(1, -1)


def _linear_kernel(x_ref, w_ref, b_ref, o_ref):
    # x_ref: (TM, K)   w_ref: (K, TN)   b_ref: (1, TN)   o_ref: (TM, TN)
    acc = jax.lax.dot_general(
        x_ref[...], w_ref[...],
        dimension_numbers=(((1,), (0,)), ((), ())),
        preferred_element_type=jnp.float32,
    )
    o_ref[...] = (acc + b_ref[...]).astype(o_ref.dtype)


def _resident_spec(block_shape, index_map):
    # Constant-index block: a second pipeline buffer is pure VMEM waste.
    try:
        return pl.BlockSpec(block_shape, index_map, pipeline_mode=pl.Buffered(1))
    except TypeError:  # older BlockSpec without pipeline_mode
        return pl.BlockSpec(block_shape, index_map)


def simple_cna_embedding(x, weight, bias, *, compute_dtype=None, out_dtype=None):
    """nn.Linear forward: y = x @ weight.T + bias over the last axis of x.

    x:      [..., input_dim]
    weight: [embed_dim, input_dim]   (PyTorch nn.Linear layout)
    bias:   [embed_dim]
    compute_dtype: optional MXU/HBM dtype for x & weight (e.g. jnp.bfloat16);
        casts are done in the wrapper, accumulation stays f32.
    out_dtype: output dtype (default: x.dtype).
    """
    embed_dim, input_dim = weight.shape
    assert x.shape[-1] == input_dim, "last axis of x must equal input_dim"
    lead = x.shape[:-1]
    M = math.prod(lead) if lead else 1
    out_dtype = out_dtype if out_dtype is not None else x.dtype

    x_dt = compute_dtype if compute_dtype is not None else x.dtype
    w_dt = compute_dtype if compute_dtype is not None else weight.dtype
    x_isz = jnp.dtype(x_dt).itemsize
    w_isz = jnp.dtype(w_dt).itemsize
    o_isz = jnp.dtype(out_dtype).itemsize

    plan = _plan(M, input_dim, embed_dim, x_isz, w_isz, o_isz)
    n_eff, tn, tm = plan["n_eff"], plan["tn"], plan["tm"]

    # NOTE: under jit with constant params this prep constant-folds; callers
    # can also cache prepare_params() output to avoid per-call HBM copies.
    w_t, b2d = prepare_params(
        weight, bias,
        n_total=n_eff if n_eff != embed_dim else None,
        compute_dtype=compute_dtype)

    x2d = x.reshape(M, input_dim)
    if compute_dtype is not None:
        x2d = x2d.astype(compute_dtype)

    if plan["tile_n"]:
        grid = (pl.cdiv(M, tm), n_eff // tn)
        in_specs = [
            pl.BlockSpec((tm, input_dim), lambda i, j: (i, 0)),   # x row tile
            pl.BlockSpec((input_dim, tn), lambda i, j: (0, j)),   # streamed W
            pl.BlockSpec((1, tn), lambda i, j: (0, j)),           # streamed bias
        ]
        out_specs = pl.BlockSpec((tm, tn), lambda i, j: (i, j))
        dim_sem = ("parallel", "parallel")
    else:
        grid = (pl.cdiv(M, tm),)
        in_specs = [
            pl.BlockSpec((tm, input_dim), lambda i: (i, 0)),        # x row tile
            _resident_spec((input_dim, n_eff), lambda i: (0, 0)),   # resident W
            _resident_spec((1, n_eff), lambda i: (0, 0)),           # resident bias
        ]
        out_specs = pl.BlockSpec((tm, n_eff), lambda i: (i, 0))
        dim_sem = ("parallel",)

    cost = pl.CostEstimate(
        flops=2 * M * input_dim * embed_dim,
        transcendentals=0,
        bytes_accessed=(M * input_dim * x_isz
                        + input_dim * n_eff * w_isz
                        + n_eff * 4
                        + M * n_eff * o_isz),
    )

    out2d = pl.pallas_call(
        _linear_kernel,
        out_shape=jax.ShapeDtypeStruct((M, n_eff), out_dtype),
        grid_spec=pltpu.PrefetchScalarGridSpec(
            num_scalar_prefetch=0,
            grid=grid,
            in_specs=in_specs,
            out_specs=out_specs,
        ),
        compiler_params=pltpu.CompilerParams(
            dimension_semantics=dim_sem,
            vmem_limit_bytes=plan["vmem_limit"],
        ),
        cost_estimate=cost,
    )(x2d, w_t, b2d)

    if n_eff != embed_dim:
        out2d = out2d[:, :embed_dim]
    return out2d.reshape(*lead, embed_dim)


def init_params(key, input_dim, embed_dim, dtype=jnp.float32):
    # Deterministic init matching nn.Linear's U(-1/sqrt(in), 1/sqrt(in)) scheme.
    k_w, k_b = jax.random.split(key)
    bound = 1.0 / (input_dim ** 0.5)
    weight = jax.random.uniform(
        k_w, (embed_dim, input_dim), dtype=dtype, minval=-bound, maxval=bound)
    bias = jax.random.uniform(
        k_b, (embed_dim,), dtype=dtype, minval=-bound, maxval=bound)
    return weight, bias


if __name__ == "__main__":
    key = jax.random.PRNGKey(0)
    k_x, k_p = jax.random.split(key)

    batch, seq, input_dim, embed_dim = 2, 8, 16, 32
    x = jax.random.normal(k_x, (batch, seq, input_dim), dtype=jnp.float32)
    weight, bias = init_params(k_p, input_dim, embed_dim)

    out = simple_cna_embedding(x, weight, bias)
    out = jax.block_until_ready(out)

    # Plain-JAX reference (same semantics as nn.Linear).  Tolerance accounts
    # for the MXU's default-precision handling of f32 operands.
    ref = x @ weight.T + bias
    assert out.shape == (batch, seq, embed_dim)
    assert jnp.allclose(out, ref, atol=2e-2, rtol=2e-2)

    print("KERNEL_OK")
</pallas_src>

<mosaic_0001>
module attributes {stable_mosaic.version = 11 : i64} {
  func.func @_linear_kernel(%arg0: i32, %arg1: memref<16x16xf32, #tpu.memory_space<vmem>>, %arg2: memref<16x32xf32, #tpu.memory_space<vmem>>, %arg3: memref<1x32xf32, #tpu.memory_space<vmem>>, %arg4: memref<16x32xf32, #tpu.memory_space<vmem>>) attributes {dimension_semantics = [#tpu.dimension_semantics<parallel>], iteration_bounds = array<i64: 1>, scalar_prefetch = 0 : i64, scratch_operands = 0 : i64, tpu.core_type = #tpu.core_type<tc>, window_params = [{transform_indices = @transform_0, window_bounds = array<i64: 16, 16>}, {pipeline_mode = #tpu.pipeline_mode<synchronous>, transform_indices = @transform_1, window_bounds = array<i64: 16, 32>}, {pipeline_mode = #tpu.pipeline_mode<synchronous>, transform_indices = @transform_2, window_bounds = array<i64: 1, 32>}, {transform_indices = @transform_3, window_bounds = array<i64: 16, 32>}]} {
    %c0 = arith.constant 0 : index
    %c0_0 = arith.constant 0 : index
    %0 = vector.load %arg1[%c0, %c0_0] : memref<16x16xf32, #tpu.memory_space<vmem>>, vector<16x16xf32>
    %c0_1 = arith.constant 0 : index
    %c0_2 = arith.constant 0 : index
    %1 = vector.load %arg2[%c0_1, %c0_2] : memref<16x32xf32, #tpu.memory_space<vmem>>, vector<16x32xf32>
    %cst = arith.constant dense<0.000000e+00> : vector<16x32xf32>
    %2 = tpu.matmul %0, %1, %cst {dimension_numbers = #tpu.dot_dimension_numbers<[1], [0], [0], [1], [0, 0, 1, 1], [], []>} : vector<16x16xf32>, vector<16x32xf32>, vector<16x32xf32> -> vector<16x32xf32>
    %c0_3 = arith.constant 0 : index
    %c0_4 = arith.constant 0 : index
    %3 = vector.load %arg3[%c0_3, %c0_4] : memref<1x32xf32, #tpu.memory_space<vmem>>, vector<1x32xf32>
    %4 = vector.broadcast %3 : vector<1x32xf32> to vector<16x32xf32>
    %5 = arith.addf %2, %4 : vector<16x32xf32>
    %c0_5 = arith.constant 0 : index
    %c0_6 = arith.constant 0 : index
    %6 = vector.load %arg4[%c0_5, %c0_6] : memref<16x32xf32, #tpu.memory_space<vmem>>, vector<16x32xf32>
    tpu.vector_store %arg4[%c0_5, %c0_6], %5 {strides = array<i32>} : memref<16x32xf32, #tpu.memory_space<vmem>>, vector<16x32xf32>,
    return
  }
  func.func @transform_0(%arg0: i32) -> (i32, i32) {
    %c0_i32 = arith.constant 0 : i32
    %c0_i32_0 = arith.constant 0 : i32
    return %arg0, %c0_i32 : i32, i32
  }
  func.func @transform_1(%arg0: i32) -> (i32, i32) {
    %c0_i32 = arith.constant 0 : i32
    %c0_i32_0 = arith.constant 0 : i32
    %c0_i32_1 = arith.constant 0 : i32
    return %c0_i32, %c0_i32_0 : i32, i32
  }
  func.func @transform_2(%arg0: i32) -> (i32, i32) {
    %c0_i32 = arith.constant 0 : i32
    %c0_i32_0 = arith.constant 0 : i32
    %c0_i32_1 = arith.constant 0 : i32
    return %c0_i32, %c0_i32_0 : i32, i32
  }
  func.func @transform_3(%arg0: i32) -> (i32, i32) {
    %c0_i32 = arith.constant 0 : i32
    %c0_i32_0 = arith.constant 0 : i32
    return %arg0, %c0_i32 : i32, i32
  }
}

</mosaic_0001>

<llo_original>
// kernel: tpu_custom_call.1
$region0: #{tpu_custom_call.1}
  #allocation0 [shape = 'u32[]', space=smem, size = 0x4, offset = 0x4, fixed_abs, tag = 'smem constant byte address 0x4 - core index']
  #allocation1 [shape = 'u32[144,128]{1,0:T(1,128)}', space=vmem, size = 0x12000, scoped, tag = 'internal scratch']
  %s0 = inlined_call_operand.hbm [shape: f32[16,16], index: 0, kind: input, shape index: {}]
  %s1 = inlined_call_operand.hbm [shape: f32[16,32], index: 1, kind: input, shape index: {}]
  %s2 = inlined_call_operand.vmem [shape: f32[1,32], index: 2, kind: input, shape index: {}]
  %s3 = inlined_call_operand.hbm [shape: f32[16,32], index: 3, kind: output, shape index: {}]
  %s4 = sld [smem:[#allocation0]]
  $region30: #{tpu_custom_call.1} parent=0
    _
  %s6 = ssub.s32 1, %s4
  %s7 = scalar_select 0, %s6, %s4
  $region1: #{tpu_custom_call.1} parent=0
    #allocation2 [shape = 'u8[8192]{0}', space=vmem, size = 0x2000, scoped, tag = 'input window, operand 0, single buffered']
    #allocation3 [shape = 's32[1]{0}', space=sflag, size = 0x4, scoped, tag = 'scoped memory for tpu_custom_call.1']
    #allocation4 [shape = 's32[1]{0}', space=sflag, size = 0x4, scoped, tag = 'scoped memory for tpu_custom_call.1']
    #allocation5 [shape = 'u8[8192]{0}', space=vmem, size = 0x2000, scoped, tag = 'input window, operand 1, single buffered']
    #allocation6 [shape = 's32[1]{0}', space=sflag, size = 0x4, scoped, tag = 'scoped memory for tpu_custom_call.1']
    #allocation7 [shape = 'u8[8192]{0}', space=vmem, size = 0x2000, scoped, tag = 'output window, operand 0, single buffered']
    %8 = vsyncpa [#allocation3], 0
    %9 = vsyncpa [#allocation6], 0
    %10 = vsyncpa [#allocation4], 0
    // Predicated region
    $region2: #{tpu_custom_call.1} parent=1 // pred_check
      _
    $region3: #{tpu_custom_call.1} parent=1 // pred_check_branch
      %12 = sbr.rel (0) target = $region5
    $region4: #{tpu_custom_call.1} parent=1 // pred_region
      %s14 = ssub.s32 256, 256
      %15 = vsyncadd [#allocation3], %s14
      %s16 = sshll.u32 [#allocation2], 4
      %s17 = int_to_ptr.vmem [resolvable:$true] %s16
      %22 = dma.hbm_to_vmem [thread:$0]  %s0, 256, %s17, [#allocation3], 128, 128, 8
    $region5: #{tpu_custom_call.1} parent=1 // pred_fallthru
      _
    // Predicated region
    $region6: #{tpu_custom_call.1} parent=1 // pred_check
      _
    $region7: #{tpu_custom_call.1} parent=1 // pred_check_branch
      %24 = sbr.rel (0) target = $region9
    $region8: #{tpu_custom_call.1} parent=1 // pred_region
      %s26 = ssub.s32 256, 256
      %27 = vsyncadd [#allocation6], %s26
      %s28 = sshll.u32 [#allocation5], 4
      %s29 = int_to_ptr.vmem [resolvable:$true] %s28
      %34 = dma.hbm_to_vmem [thread:$0]  %s1, 256, %s29, [#allocation6], 128, 128, 8
    $region9: #{tpu_custom_call.1} parent=1 // pred_fallthru
      _
    // Predicated region
    $region10: #{tpu_custom_call.1} parent=1 // pred_check
      _
    $region11: #{tpu_custom_call.1} parent=1 // pred_check_branch
      %36 = sbr.rel (0) target = $region13
    $region12: #{tpu_custom_call.1} parent=1 // pred_region
      _
    $region13: #{tpu_custom_call.1} parent=1 // pred_fallthru
      _
    // Predicated region
    $region14: #{tpu_custom_call.1} parent=1 // pred_check
      _
    $region15: #{tpu_custom_call.1} parent=1 // pred_check_branch
      %38 = sbr.rel (0) target = $region17
    $region16: #{tpu_custom_call.1} parent=1 // pred_region
      %39 = dma.done [#allocation3], 256
    $region17: #{tpu_custom_call.1} parent=1 // pred_fallthru
      _
    // Predicated region
    $region18: #{tpu_custom_call.1} parent=1 // pred_check
      _
    $region19: #{tpu_custom_call.1} parent=1 // pred_check_branch
      %41 = sbr.rel (0) target = $region21
    $region20: #{tpu_custom_call.1} parent=1 // pred_region
      %42 = dma.done [#allocation6], 256
    $region21: #{tpu_custom_call.1} parent=1 // pred_fallthru
      _
    %v43 = vld [vmem:[#allocation2] sm:$0xff]
    %v44 = vld [vmem:[#allocation2 + $0x8] sm:$0xff]
    %v45 = vld [vmem:[#allocation5] sm:$0xff]
    %v46 = vld [vmem:[#allocation5 + $0x8] sm:$0xff]
    %v47 = vld [vmem:[%s2] sm:$0x1]
    %v49 = vlaneseq
    %v50 = vshrl.u32 %v49, 7
    %v51 = vsub.s32 0, %v50
    %v52 = vrot.slane %v47, %v51
    %vm54 = vcmask 130048
    %v56 = vsel %vm54, %v43, 0
    %v59 = vsel %vm54, %v44, 0
    %61 = vmatprep.subr.mxu0 0.0
    %62 = vmatpush1.msra.mxu0 %v45
    %63 = vmatprep.subr.mxu0 0.0
    %64 = vmatpush1.msra.mxu0 %v46
    %65 = vmatprep.subr.mxu0 0.0
    %66 = vmatpush1.msra.mxu0 0.0
    %67 = vmatprep.subr.mxu0 0.0
    %68 = vmatpush1.msra.mxu0 0.0
    %69 = vmatprep.subr.mxu0 0.0
    %70 = vmatpush1.msra.mxu0 0.0
    %71 = vmatprep.subr.mxu0 0.0
    %72 = vmatpush1.msra.mxu0 0.0
    %73 = vmatprep.subr.mxu0 0.0
    %74 = vmatpush1.msra.mxu0 0.0
    %75 = vmatprep.subr.mxu0 0.0
    %76 = vmatpush1.msra.mxu0 0.0
    %77 = vmatprep.subr.mxu0 0.0
    %78 = vmatpush1.msra.mxu0 0.0
    %79 = vmatprep.subr.mxu0 0.0
    %80 = vmatpush1.msra.mxu0 0.0
    %81 = vmatprep.subr.mxu0 0.0
    %82 = vmatpush1.msra.mxu0 0.0
    %83 = vmatprep.subr.mxu0 0.0
    %84 = vmatpush1.msra.mxu0 0.0
    %85 = vmatprep.subr.mxu0 0.0
    %86 = vmatpush1.msra.mxu0 0.0
    %87 = vmatprep.subr.mxu0 0.0
    %88 = vmatpush1.msra.mxu0 0.0
    %89 = vmatprep.subr.mxu0 0.0
    %90 = vmatpush1.msra.mxu0 0.0
    %91 = vmatprep.subr.mxu0 0.0
    %92 = vmatpush1.msra.mxu0 0.0
    %93 = vmatprep.subr.mxu0 0.0
    %94 = vmatpush1.msra.mxu0 0.0
    %95 = vmatprep.subr.mxu0 0.0
    %96 = vmatpush1.msra.mxu0 0.0
    %97 = vmatprep.subr.mxu0 0.0
    %98 = vmatpush1.msra.mxu0 0.0
    %99 = vmatprep.subr.mxu0 0.0
    %100 = vmatpush1.msra.mxu0 0.0
    %101 = vmatprep.subr.mxu0 0.0
    %102 = vmatpush1.msra.mxu0 0.0
    %103 = vmatprep.subr.mxu0 0.0
    %104 = vmatpush1.msra.mxu0 0.0
    %105 = vmatprep.subr.mxu0 0.0
    %106 = vmatpush1.msra.mxu0 0.0
    %107 = vmatprep.subr.mxu0 0.0
    %108 = vmatpush1.msra.mxu0 0.0
    %109 = vmatprep.subr.mxu0 0.0
    %110 = vmatpush1.msra.mxu0 0.0
    %111 = vmatprep.subr.mxu0 0.0
    %112 = vmatpush1.msra.mxu0 0.0
    %113 = vmatprep.subr.mxu0 0.0
    %114 = vmatpush1.msra.mxu0 0.0
    %115 = vmatprep.subr.mxu0 0.0
    %116 = vmatpush1.msra.mxu0 0.0
    %117 = vmatprep.subr.mxu0 0.0
    %118 = vmatpush1.msra.mxu0 0.0
    %119 = vmatprep.subr.mxu0 0.0
    %120 = vmatpush1.msra.mxu0 0.0
    %121 = vmatprep.subr.mxu0 0.0
    %122 = vmatpush1.msra.mxu0 0.0
    %123 = vmatprep.subr.mxu0 0.0
    %124 = vmatpush1.msra.mxu0 0.0
    %125 = vmatprep.mubr.f32.mxu0 0.0
    %126 = vmatmul.mubr.f32.gmra.mrb[0].mxu0 %v56
    %v127 = vpop.f32.mrb[0].mxu0
    %v128 = vadd.f32 %v52, %v127
    %v129 = vpop.f32.mrb[0].mxu0
    %130 = vmatprep.mubr.f32.mxu0 0.0
    %131 = vmatmul.mubr.f32.gmra.mrb[0].mxu0 %v59
    %v132 = vpop.f32.mrb[0].mxu0
    %v133 = vadd.f32 %v52, %v132
    %v134 = vpop.f32.mrb[0].mxu0
    %135 = vdwg.mxu0
    %vm136 = vcmask 261120
    %137 = vst.msk [vmem:[#allocation7] sm:$0xff] %vm136, %v128
    %138 = vst.msk [vmem:[#allocation7 + $0x8] sm:$0xff] %vm136, %v133
    // Predicated region
    $region22: #{tpu_custom_call.1} parent=1 // pred_check
      _
    $region23: #{tpu_custom_call.1} parent=1 // pred_check_branch
      %140 = sbr.rel (0) target = $region25
    $region24: #{tpu_custom_call.1} parent=1 // pred_region
      %s142 = ssub.s32 256, 256
      %143 = vsyncadd [#allocation4], %s142
      %s144 = sshll.u32 [#allocation7], 4
      %s145 = int_to_ptr.vmem [resolvable:$true] %s144
      %150 = dma.vmem_to_hbm [thread:$0]  %s145, 256, %s3, [#allocation4], 128, 128, 8
    $region25: #{tpu_custom_call.1} parent=1 // pred_fallthru
      _
    // Predicated region
    $region26: #{tpu_custom_call.1} parent=1 // pred_check
      _
    $region27: #{tpu_custom_call.1} parent=1 // pred_check_branch
      %152 = sbr.rel (0) target = $region29
    $region28: #{tpu_custom_call.1} parent=1 // pred_region
      %153 = dma.done [#allocation4], 256
    $region29: #{tpu_custom_call.1} parent=1 // pred_fallthru
      _
    %154 = vsyncpa [#allocation3], 1
    %155 = vsyncpa [#allocation6], 1
    %156 = vsyncpa [#allocation4], 1

</llo_original>
